<compile_context>
chip_gen: v5e
topology: v5e:2x2
jax: 0.10.0
libtpu: 0.0.40
codegen_flags: <defaults>
</compile_context>

<pallas_src>
import functools

import jax
import jax.numpy as jnp
from jax.experimental import pallas as pl
from jax.experimental.pallas import tpu as pltpu

SMOOTH = 1.0       # DiceLoss.__init__: self.smooth = 1 (no learnable parameters)
_MAX_TILE_S = 2048  # lanes per spatial tile (1024-2048 is the HBM-roofline sweet spot)


def _round_up(x, m):
    return ((x + m - 1) // m) * m


def _dice_kernel(x_ref, t_ref, dice_ref, inter_ref, card_ref, *, s_total, tile_s):
    # x_ref   : (1, C, TILE_S) logits (native dtype) for batch b, spatial tile s
    # t_ref   : (1, 1, TILE_S) int32 labels (-1 in spatial padding)
    # dice_ref: (1, 8, 128)    f32 lane-dense broadcast of the per-batch dice score
    # inter_ref / card_ref: (8, 128) f32 VMEM accumulators (persist across s steps)
    s = pl.program_id(1)
    n_s = pl.num_programs(1)

    @pl.when(s == 0)
    def _init():
        inter_ref[...] = jnp.zeros_like(inter_ref)
        card_ref[...] = jnp.zeros_like(card_ref)

    x = x_ref[0].astype(jnp.float32)      # (C, TILE_S) -- on-chip cast, bf16 input OK
    t = t_ref[0]                          # (1, TILE_S) int32

    C = x.shape[0]

    # Mask out spatial padding introduced when rounding S up to a tile multiple.
    pos = s * tile_s + jax.lax.broadcasted_iota(jnp.int32, (1, tile_s), 1)
    pos_mask = (pos < s_total).astype(jnp.float32)          # (1, TILE_S)

    # Channel softmax pieces without materialising softmax or one-hot (dim=1 in NCHW).
    m = jnp.max(x, axis=0, keepdims=True)                   # (1, TILE_S)
    e = jnp.exp(x - m)                                       # (C, TILE_S)  (EUP)
    denom = jnp.sum(e, axis=0, keepdims=True)                # (1, TILE_S)
    inv = pl.reciprocal(denom, approx=False)                 # exact; approx=True ok at ~1e-4

    ch = jax.lax.broadcasted_iota(jnp.int32, (C, tile_s), 0)
    # exp at the target channel (0 where label is out of range) -> softmax numerator.
    num = jnp.sum(jnp.where(ch == t, e, 0.0), axis=0, keepdims=True)   # (1, TILE_S)

    # sum_c softmax == denom * inv (== 1 per real pixel); sum_c onehot == valid label.
    valid = jnp.logical_and(t >= 0, t < C).astype(jnp.float32)         # (1, TILE_S)

    inter_ref[...] += jnp.sum(num * inv * pos_mask)
    card_ref[...] += jnp.sum((denom * inv + valid) * pos_mask)

    @pl.when(s == n_s - 1)
    def _finalize():
        dice = (2.0 * inter_ref[...] + SMOOTH) / (card_ref[...] + SMOOTH)  # (8, 128)
        dice_ref[0] = dice.astype(dice_ref.dtype)


def dice_loss(logits_nchw, targets_bhw, *, tile_s=None):
    """logits_nchw: (B, C, H, W) logits (f32 or bf16); targets_bhw: (B, H, W) int labels."""
    B, C, H, W = logits_nchw.shape
    if targets_bhw.shape != (B, H, W):
        raise ValueError("input and target spatial shapes must match")
    S = H * W

    if tile_s is None:
        tile_s = min(_MAX_TILE_S, _round_up(S, 128))
    assert tile_s % 128 == 0, "tile_s must be a multiple of 128 lanes"
    s_pad = _round_up(S, tile_s)
    n_s = s_pad // tile_s

    # Keep the logits in their native dtype (no f32 upcast in HBM traffic).
    x = logits_nchw.reshape(B, C, S)
    t = targets_bhw.reshape(B, 1, S).astype(jnp.int32)
    if s_pad != S:
        x = jnp.pad(x, ((0, 0), (0, 0), (0, s_pad - S)))
        t = jnp.pad(t, ((0, 0), (0, 0), (0, s_pad - S)), constant_values=-1)

    kernel = functools.partial(_dice_kernel, s_total=S, tile_s=tile_s)

    dice = pl.pallas_call(
        kernel,
        out_shape=jax.ShapeDtypeStruct((B, 8, 128), jnp.float32),
        grid_spec=pltpu.PrefetchScalarGridSpec(
            num_scalar_prefetch=0,
            grid=(B, n_s),
            in_specs=[
                pl.BlockSpec((1, C, tile_s), lambda b, s: (b, 0, s)),
                pl.BlockSpec((1, 1, tile_s), lambda b, s: (b, 0, s)),
            ],
            out_specs=pl.BlockSpec((1, 8, 128), lambda b, s: (b, 0, 0)),
            scratch_shapes=[
                pltpu.VMEM((8, 128), jnp.float32),   # intersection accumulator
                pltpu.VMEM((8, 128), jnp.float32),   # cardinality accumulator
            ],
        ),
        compiler_params=pltpu.CompilerParams(
            dimension_semantics=("parallel", "arbitrary"),
        ),
    )(x, t)

    dice_per_batch = dice[:, 0, 0]            # (B,)
    return jnp.mean(1.0 - dice_per_batch)     # scalar, matches torch.mean(1 - dice_score)


def _dice_loss_ref(logits_nchw, targets_bhw):
    """Pure-JAX reference mirroring the PyTorch forward, for a sanity check."""
    B, C, H, W = logits_nchw.shape
    soft = jax.nn.softmax(logits_nchw.astype(jnp.float32), axis=1)
    onehot = jax.nn.one_hot(targets_bhw, C, dtype=jnp.float32)        # (B,H,W,C)
    onehot = jnp.transpose(onehot, (0, 3, 1, 2))                      # (B,C,H,W)
    inter = jnp.sum(soft * onehot, axis=(1, 2, 3))
    card = jnp.sum(soft + onehot, axis=(1, 2, 3))
    dice = (2.0 * inter + SMOOTH) / (card + SMOOTH)
    return jnp.mean(1.0 - dice)


if __name__ == "__main__":
    key = jax.random.PRNGKey(0)
    k1, k2, k3, k4 = jax.random.split(key, 4)

    # Main check: f32 logits, spatial size a clean multiple of the lane width.
    B, C, H, W = 2, 4, 16, 16
    logits = jax.random.normal(k1, (B, C, H, W), dtype=jnp.float32)
    targets = jax.random.randint(k2, (B, H, W), 0, C, dtype=jnp.int32)

    loss = jax.block_until_ready(dice_loss(logits, targets))
    ref = jax.block_until_ready(_dice_loss_ref(logits, targets))
    assert jnp.allclose(loss, ref, atol=1e-5, rtol=1e-5), (loss, ref)

    # bf16 logits stream through the kernel unconverted (half the HBM traffic).
    loss_bf16 = jax.block_until_ready(dice_loss(logits.astype(jnp.bfloat16), targets))
    ref_bf16 = jax.block_until_ready(
        _dice_loss_ref(logits.astype(jnp.bfloat16).astype(jnp.float32), targets))
    assert jnp.allclose(loss_bf16, ref_bf16, atol=2e-2, rtol=2e-2), (loss_bf16, ref_bf16)

    # Ragged spatial size + forced small tile: exercises padding mask and the
    # multi-step accumulator (init/finalize via pl.when) path.
    B2, C2, H2, W2 = 2, 3, 10, 13
    logits2 = jax.random.normal(k3, (B2, C2, H2, W2), dtype=jnp.float32)
    targets2 = jax.random.randint(k4, (B2, H2, W2), 0, C2, dtype=jnp.int32)
    loss2 = jax.block_until_ready(dice_loss(logits2, targets2, tile_s=128))
    ref2 = jax.block_until_ready(_dice_loss_ref(logits2, targets2))
    assert jnp.allclose(loss2, ref2, atol=1e-5, rtol=1e-5), (loss2, ref2)

    print("KERNEL_OK")
</pallas_src>

<mosaic_0001>
module attributes {stable_mosaic.version = 11 : i64} {
  func.func @_dice_kernel(%arg0: i32, %arg1: i32, %arg2: memref<1x4x256xf32, #tpu.memory_space<vmem>>, %arg3: memref<1x1x256xi32, #tpu.memory_space<vmem>>, %arg4: memref<1x8x128xf32, #tpu.memory_space<vmem>>, %arg5: memref<8x128xf32, #tpu.memory_space<vmem>>, %arg6: memref<8x128xf32, #tpu.memory_space<vmem>>) attributes {dimension_semantics = [#tpu.dimension_semantics<parallel>, #tpu.dimension_semantics<arbitrary>], iteration_bounds = array<i64: 2, 1>, scalar_prefetch = 0 : i64, scratch_operands = 2 : i64, tpu.core_type = #tpu.core_type<tc>, window_params = [{transform_indices = @transform_0, window_bounds = array<i64: 1, 4, 256>}, {transform_indices = @transform_1, window_bounds = array<i64: 1, 1, 256>}, {transform_indices = @transform_2, window_bounds = array<i64: 1, 8, 128>}]} {
    %c0_i32 = arith.constant 0 : i32
    %0 = arith.cmpi eq, %arg1, %c0_i32 : i32
    %1 = arith.extui %0 : i1 to i32
    %c0_i32_0 = arith.constant 0 : i32
    %2 = arith.cmpi ne, %1, %c0_i32_0 : i32
    scf.if %2 {
      %cst_23 = arith.constant 0.000000e+00 : f32
      %61 = vector.broadcast %cst_23 : f32 to vector<8x128xf32>
      %c0_24 = arith.constant 0 : index
      %c0_25 = arith.constant 0 : index
      %62 = vector.load %arg5[%c0_24, %c0_25] : memref<8x128xf32, #tpu.memory_space<vmem>>, vector<8x128xf32>
      tpu.vector_store %arg5[%c0_24, %c0_25], %61 {strides = array<i32>} : memref<8x128xf32, #tpu.memory_space<vmem>>, vector<8x128xf32>,
      %cst_26 = arith.constant 0.000000e+00 : f32
      %63 = vector.broadcast %cst_26 : f32 to vector<8x128xf32>
      %c0_27 = arith.constant 0 : index
      %c0_28 = arith.constant 0 : index
      %64 = vector.load %arg6[%c0_27, %c0_28] : memref<8x128xf32, #tpu.memory_space<vmem>>, vector<8x128xf32>
      tpu.vector_store %arg6[%c0_27, %c0_28], %63 {strides = array<i32>} : memref<8x128xf32, #tpu.memory_space<vmem>>, vector<8x128xf32>,
    } else {
    }
    %c0 = arith.constant 0 : index
    %c0_1 = arith.constant 0 : index
    %c0_2 = arith.constant 0 : index
    %3 = vector.load %arg2[%c0, %c0_1, %c0_2] : memref<1x4x256xf32, #tpu.memory_space<vmem>>, vector<1x4x256xf32>
    %4 = vector.shape_cast %3 : vector<1x4x256xf32> to vector<4x256xf32>
    %c0_3 = arith.constant 0 : index
    %c0_4 = arith.constant 0 : index
    %c0_5 = arith.constant 0 : index
    %5 = vector.load %arg3[%c0_3, %c0_4, %c0_5] : memref<1x1x256xi32, #tpu.memory_space<vmem>>, vector<1x1x256xi32>
    %6 = vector.shape_cast %5 : vector<1x1x256xi32> to vector<1x256xi32>
    %c256_i32 = arith.constant 256 : i32
    %7 = arith.muli %arg1, %c256_i32 : i32
    %8 = tpu.iota {dimensions = array<i32: 1>} : vector<1x256xi32>
    %9 = vector.broadcast %7 : i32 to vector<1x256xi32>
    %10 = arith.addi %9, %8 : vector<1x256xi32>
    %c256_i32_6 = arith.constant 256 : i32
    %11 = vector.broadcast %c256_i32_6 : i32 to vector<1x256xi32>
    %12 = arith.cmpi slt, %10, %11 : vector<1x256xi32>
    %13 = arith.extui %12 : vector<1x256xi1> to vector<1x256xi32>
    %14 = arith.sitofp %13 : vector<1x256xi32> to vector<1x256xf32>
    %cst = arith.constant dense<0xFF800000> : vector<256xf32>
    %15 = vector.multi_reduction <maximumf>, %4, %cst [0] : vector<4x256xf32> to vector<256xf32>
    %16 = vector.shape_cast %15 : vector<256xf32> to vector<1x256xf32>
    %17 = vector.broadcast %16 : vector<1x256xf32> to vector<4x256xf32>
    %18 = arith.subf %4, %17 : vector<4x256xf32>
    %19 = math.exp %18 : vector<4x256xf32>
    %cst_7 = arith.constant dense<0.000000e+00> : vector<256xf32>
    %20 = vector.multi_reduction <add>, %19, %cst_7 [0] : vector<4x256xf32> to vector<256xf32>
    %21 = vector.shape_cast %20 : vector<256xf32> to vector<1x256xf32>
    %22 = tpu.reciprocal %21 : vector<1x256xf32> -> vector<1x256xf32>
    %23 = tpu.iota {dimensions = array<i32: 0>} : vector<4x256xi32>
    %24 = vector.broadcast %6 : vector<1x256xi32> to vector<4x256xi32>
    %25 = arith.cmpi eq, %23, %24 : vector<4x256xi32>
    %cst_8 = arith.constant 0.000000e+00 : f32
    %26 = vector.broadcast %cst_8 : f32 to vector<4x256xf32>
    %27 = arith.select %25, %19, %26 : vector<4x256xi1>, vector<4x256xf32>
    %cst_9 = arith.constant dense<0.000000e+00> : vector<256xf32>
    %28 = vector.multi_reduction <add>, %27, %cst_9 [0] : vector<4x256xf32> to vector<256xf32>
    %29 = vector.shape_cast %28 : vector<256xf32> to vector<1x256xf32>
    %c0_i32_10 = arith.constant 0 : i32
    %30 = vector.broadcast %c0_i32_10 : i32 to vector<1x256xi32>
    %31 = arith.cmpi sge, %6, %30 : vector<1x256xi32>
    %c4_i32 = arith.constant 4 : i32
    %32 = vector.broadcast %c4_i32 : i32 to vector<1x256xi32>
    %33 = arith.cmpi slt, %6, %32 : vector<1x256xi32>
    %34 = arith.andi %31, %33 : vector<1x256xi1>
    %35 = arith.extui %34 : vector<1x256xi1> to vector<1x256xi32>
    %36 = arith.sitofp %35 : vector<1x256xi32> to vector<1x256xf32>
    %c0_11 = arith.constant 0 : index
    %c0_12 = arith.constant 0 : index
    %37 = vector.load %arg5[%c0_11, %c0_12] : memref<8x128xf32, #tpu.memory_space<vmem>>, vector<8x128xf32>
    %38 = arith.mulf %29, %22 : vector<1x256xf32>
    %39 = arith.mulf %38, %14 : vector<1x256xf32>
    %40 = vector.shape_cast %39 : vector<1x256xf32> to vector<1x1x256xf32>
    %cst_13 = arith.constant dense<0.000000e+00> : vector<1xf32>
    %41 = vector.multi_reduction <add>, %40, %cst_13 [1, 2] : vector<1x1x256xf32> to vector<1xf32>
    %42 = vector.shape_cast %41 : vector<1xf32> to vector<1x1x1xf32>
    %43 = vector.extract %42[0, 0, 0] : f32 from vector<1x1x1xf32>
    %44 = vector.broadcast %43 : f32 to vector<8x128xf32>
    %45 = arith.addf %37, %44 : vector<8x128xf32>
    %c0_14 = arith.constant 0 : index
    %c0_15 = arith.constant 0 : index
    %46 = vector.load %arg5[%c0_14, %c0_15] : memref<8x128xf32, #tpu.memory_space<vmem>>, vector<8x128xf32>
    tpu.vector_store %arg5[%c0_14, %c0_15], %45 {strides = array<i32>} : memref<8x128xf32, #tpu.memory_space<vmem>>, vector<8x128xf32>,
    %c0_16 = arith.constant 0 : index
    %c0_17 = arith.constant 0 : index
    %47 = vector.load %arg6[%c0_16, %c0_17] : memref<8x128xf32, #tpu.memory_space<vmem>>, vector<8x128xf32>
    %48 = arith.mulf %21, %22 : vector<1x256xf32>
    %49 = arith.addf %48, %36 : vector<1x256xf32>
    %50 = arith.mulf %49, %14 : vector<1x256xf32>
    %51 = vector.shape_cast %50 : vector<1x256xf32> to vector<1x1x256xf32>
    %cst_18 = arith.constant dense<0.000000e+00> : vector<1xf32>
    %52 = vector.multi_reduction <add>, %51, %cst_18 [1, 2] : vector<1x1x256xf32> to vector<1xf32>
    %53 = vector.shape_cast %52 : vector<1xf32> to vector<1x1x1xf32>
    %54 = vector.extract %53[0, 0, 0] : f32 from vector<1x1x1xf32>
    %55 = vector.broadcast %54 : f32 to vector<8x128xf32>
    %56 = arith.addf %47, %55 : vector<8x128xf32>
    %c0_19 = arith.constant 0 : index
    %c0_20 = arith.constant 0 : index
    %57 = vector.load %arg6[%c0_19, %c0_20] : memref<8x128xf32, #tpu.memory_space<vmem>>, vector<8x128xf32>
    tpu.vector_store %arg6[%c0_19, %c0_20], %56 {strides = array<i32>} : memref<8x128xf32, #tpu.memory_space<vmem>>, vector<8x128xf32>,
    %c0_i32_21 = arith.constant 0 : i32
    %58 = arith.cmpi eq, %arg1, %c0_i32_21 : i32
    %59 = arith.extui %58 : i1 to i32
    %c0_i32_22 = arith.constant 0 : i32
    %60 = arith.cmpi ne, %59, %c0_i32_22 : i32
    scf.if %60 {
      %c0_23 = arith.constant 0 : index
      %c0_24 = arith.constant 0 : index
      %61 = vector.load %arg5[%c0_23, %c0_24] : memref<8x128xf32, #tpu.memory_space<vmem>>, vector<8x128xf32>
      %cst_25 = arith.constant 2.000000e+00 : f32
      %62 = vector.broadcast %cst_25 : f32 to vector<8x128xf32>
      %63 = arith.mulf %62, %61 : vector<8x128xf32>
      %cst_26 = arith.constant 1.000000e+00 : f32
      %64 = vector.broadcast %cst_26 : f32 to vector<8x128xf32>
      %65 = arith.addf %63, %64 : vector<8x128xf32>
      %c0_27 = arith.constant 0 : index
      %c0_28 = arith.constant 0 : index
      %66 = vector.load %arg6[%c0_27, %c0_28] : memref<8x128xf32, #tpu.memory_space<vmem>>, vector<8x128xf32>
      %cst_29 = arith.constant 1.000000e+00 : f32
      %67 = vector.broadcast %cst_29 : f32 to vector<8x128xf32>
      %68 = arith.addf %66, %67 : vector<8x128xf32>
      %69 = arith.divf %65, %68 : vector<8x128xf32>
      %c0_30 = arith.constant 0 : index
      %c0_31 = arith.constant 0 : index
      %c0_32 = arith.constant 0 : index
      %70 = vector.load %arg4[%c0_30, %c0_31, %c0_32] : memref<1x8x128xf32, #tpu.memory_space<vmem>>, vector<1x8x128xf32>
      %71 = vector.shape_cast %70 : vector<1x8x128xf32> to vector<8x128xf32>
      %72 = vector.shape_cast %69 : vector<8x128xf32> to vector<1x8x128xf32>
      tpu.vector_store %arg4[%c0_30, %c0_31, %c0_32], %72 {strides = array<i32>} : memref<1x8x128xf32, #tpu.memory_space<vmem>>, vector<1x8x128xf32>,
    } else {
    }
    return
  }
  func.func @transform_0(%arg0: i32, %arg1: i32) -> (i32, i32, i32) {
    %c0_i32 = arith.constant 0 : i32
    %c0_i32_0 = arith.constant 0 : i32
    return %arg0, %c0_i32, %arg1 : i32, i32, i32
  }
  func.func @transform_1(%arg0: i32, %arg1: i32) -> (i32, i32, i32) {
    %c0_i32 = arith.constant 0 : i32
    %c0_i32_0 = arith.constant 0 : i32
    return %arg0, %c0_i32, %arg1 : i32, i32, i32
  }
  func.func @transform_2(%arg0: i32, %arg1: i32) -> (i32, i32, i32) {
    %c0_i32 = arith.constant 0 : i32
    %c0_i32_0 = arith.constant 0 : i32
    %c0_i32_1 = arith.constant 0 : i32
    return %arg0, %c0_i32, %c0_i32_0 : i32, i32, i32
  }
}

</mosaic_0001>

<llo_original>
// kernel: tpu_custom_call.1
$region0: #{tpu_custom_call.1}
  #allocation0 [shape = 'u32[]', space=smem, size = 0x4, offset = 0x4, fixed_abs, tag = 'smem constant byte address 0x4 - core index']
  #allocation1 [shape = 'u32[72,128]{1,0:T(1,128)}', space=vmem, size = 0x9000, scoped, tag = 'internal scratch']
  #allocation2 [shape = 'f32[8,128]{1,0:T(8,128)}', space=vmem, size = 0x1000, scoped, tag = 'scratch operand']
  #allocation3 [shape = 'f32[8,128]{1,0:T(8,128)}', space=vmem, size = 0x1000, scoped, tag = 'scratch operand']
  %s0 = inlined_call_operand.hbm [shape: f32[2,4,256], index: 0, kind: input, shape index: {}]
  %s1 = inlined_call_operand.hbm [shape: s32[2,1,256], index: 1, kind: input, shape index: {}]
  %s2 = inlined_call_operand.hbm [shape: f32[2,8,128], index: 2, kind: output, shape index: {}]
  %s3 = sld [smem:[#allocation0]]
  $region57: #{tpu_custom_call.1} parent=0
    _
  %s5 = ssub.s32 1, %s3
  %s6 = scalar_select 0, %s5, %s3
  $region1: #{tpu_custom_call.1} parent=0
    #allocation4 [shape = 'u8[8192]{0}', space=vmem, size = 0x2000, scoped, tag = 'input window, operand 0']
    #allocation5 [shape = 's32[2]{0}', space=sflag, size = 0x8, scoped, tag = 'scoped memory for tpu_custom_call.1']
    #allocation6 [shape = 's32[2]{0}', space=sflag, size = 0x8, scoped, tag = 'scoped memory for tpu_custom_call.1']
    #allocation7 [shape = 'u8[2048]{0}', space=vmem, size = 0x800, scoped, tag = 'input window, operand 1']
    #allocation8 [shape = 's32[2]{0}', space=sflag, size = 0x8, scoped, tag = 'scoped memory for tpu_custom_call.1']
    #allocation9 [shape = 'u8[8192]{0}', space=vmem, size = 0x2000, scoped, tag = 'output window, operand 0']
    %7 = vsyncpa [#allocation5], 0
    %s8 = scalar_lea.sflag [#allocation5], 1
    %9 = vsyncpa %s8, 0
    %10 = vsyncpa [#allocation8], 0
    %s11 = scalar_lea.sflag [#allocation8], 1
    %12 = vsyncpa %s11, 0
    %13 = vsyncpa [#allocation6], 0
    %s14 = scalar_lea.sflag [#allocation6], 1
    %15 = vsyncpa %s14, 0
    loop: start=0, step=1, limit=4
    $region2: #{tpu_custom_call.1} parent=1 // loop_pre_header
      _
    $region3: #{tpu_custom_call.1} parent=1 // loop_header
      %s17 = sphi 0, %s21
      %p18 = scmp.ge.s32.totalorder %s17, 4
      %s24 = sphi 0, %s36
      %s25 = sphi 0, %s32
      %s26 = sphi 0, %s24
      %s27 = sphi 0, %s25
      %s28 = sphi 0, %s26
      %s29 = sphi 0, %s27
      %s41 = sphi 0, %s43
      %s44 = sphi 0, %s41
      %s45 = sphi 0, %s44
      %s61 = sphi 0, %s45
      %s69 = sphi 0, %s71
      %s72 = sphi 0, %s69
      %s73 = sphi 0, %s72
      %s89 = sphi 0, %s73
      %s95 = sphi 0, %s97
      %s98 = sphi 0, %s95
      %s99 = sphi 0, %s98
      %s115 = sphi 0, %s99
    $region4: #{tpu_custom_call.1} parent=1 // loop_header_branch
      %20 = sbr.rel (%p18) target = $region8
    $region5: #{tpu_custom_call.1} parent=1 // loop_body
      %s22 = ssub.s32 %s17, 1
      %s23 = ssub.s32 %s17, 2
      %s30 = sadd.s32 1, %s25
      %p31 = scmp.ge.s32.totalorder %s30, 1
      %s32 = scalar_select %p31, 0, %s30
      %s33 = sadd.s32 1, %s24
      %s34 = scalar_select %p31, %s33, %s24
      %p35 = scmp.ge.s32.totalorder %s34, 2
      %s36 = scalar_select %p35, 0, %s34
      %s37 = ssub.s32 %s24, %s36
      %s38 = ssub.s32 %s25, %s32
      %s39 = sor.u32 %s37, %s38
      %p40 = scmp.eq.s32.totalorder %s39, 0
      %s42 = sadd.s32 %s41, 1
      %s43 = scalar_select %p40, %s41, %s42
      %p46 = pneg %p40
      %p47 = scmp.eq.s32.totalorder %s17, 1
      %p48 = por %p46, %p47
      %p49 = scmp.ne.s32.totalorder %s41, %s44
      %p50 = scmp.eq.s32.totalorder %s17, 0
      %p51 = por %p49, %p50
      %p52 = scmp.ne.s32.totalorder %s41, %s44
      %p53 = scmp.eq.s32.totalorder %s22, 1
      %p54 = por %p52, %p53
      %p55 = scmp.ne.s32.totalorder %s44, %s45
      %p56 = scmp.eq.s32.totalorder %s22, 0
      %p57 = por %p55, %p56
      %p58 = scmp.ne.s32.totalorder %s44, %s45
      %p59 = scmp.eq.s32.totalorder %s23, 1
      %p60 = por %p58, %p59
      %p62 = scmp.ne.s32.totalorder %s45, %s61
      %p63 = scmp.eq.s32.totalorder %s23, 0
      %p64 = por %p62, %p63
      %s65 = ssub.s32 %s24, %s36
      %s66 = ssub.s32 %s25, %s32
      %s67 = sor.u32 %s65, %s66
      %p68 = scmp.eq.s32.totalorder %s67, 0
      %s70 = sadd.s32 %s69, 1
      %s71 = scalar_select %p68, %s69, %s70
      %p74 = pneg %p68
      %p75 = scmp.eq.s32.totalorder %s17, 1
      %p76 = por %p74, %p75
      %p77 = scmp.ne.s32.totalorder %s69, %s72
      %p78 = scmp.eq.s32.totalorder %s17, 0
      %p79 = por %p77, %p78
      %p80 = scmp.ne.s32.totalorder %s69, %s72
      %p81 = scmp.eq.s32.totalorder %s22, 1
      %p82 = por %p80, %p81
      %p83 = scmp.ne.s32.totalorder %s72, %s73
      %p84 = scmp.eq.s32.totalorder %s22, 0
      %p85 = por %p83, %p84
      %p86 = scmp.ne.s32.totalorder %s72, %s73
      %p87 = scmp.eq.s32.totalorder %s23, 1
      %p88 = por %p86, %p87
      %p90 = scmp.ne.s32.totalorder %s73, %s89
      %p91 = scmp.eq.s32.totalorder %s23, 0
      %p92 = por %p90, %p91
      %s93 = ssub.s32 %s24, %s36
      %p94 = scmp.eq.s32.totalorder %s93, 0
      %s96 = sadd.s32 %s95, 1
      %s97 = scalar_select %p94, %s95, %s96
      %p100 = pneg %p94
      %p101 = scmp.eq.s32.totalorder %s17, 1
      %p102 = por %p100, %p101
      %p103 = scmp.ne.s32.totalorder %s95, %s98
      %p104 = scmp.eq.s32.totalorder %s17, 0
      %p105 = por %p103, %p104
      %p106 = scmp.ne.s32.totalorder %s95, %s98
      %p107 = scmp.eq.s32.totalorder %s22, 1
      %p108 = por %p106, %p107
      %p109 = scmp.ne.s32.totalorder %s98, %s99
      %p110 = scmp.eq.s32.totalorder %s22, 0
      %p111 = por %p109, %p110
      %p112 = scmp.ne.s32.totalorder %s98, %s99
      %p113 = scmp.eq.s32.totalorder %s23, 1
      %p114 = por %p112, %p113
      %p116 = scmp.ne.s32.totalorder %s99, %s115
      %p117 = scmp.eq.s32.totalorder %s23, 0
      %p118 = por %p116, %p117
      %p119 = scmp.le.s32.totalorder 1, %s17
      %p120 = scmp.lt.s32.totalorder %s17, 3
      %p121 = pnand %p119, %p120
      %p122 = pneg %p121
      // Predicated region
      $region9: #{tpu_custom_call.1} parent=5 // pred_check
        _
      $region10: #{tpu_custom_call.1} parent=5 // pred_check_branch
        %124 = sbr.rel (%p121) target = $region12
      $region11: #{tpu_custom_call.1} parent=5 // pred_region
        %s125 = ssub.s32 %s17, 1
      $region12: #{tpu_custom_call.1} parent=5 // pred_fallthru
        _
      %p126 = scmp.lt.s32.totalorder %s17, 2
      // Predicated region
      $region13: #{tpu_custom_call.1} parent=5 // pred_check
        %p127 = pneg %p126
      $region14: #{tpu_custom_call.1} parent=5 // pred_check_branch
        %129 = sbr.rel (%p127) target = $region16
      $region15: #{tpu_custom_call.1} parent=5 // pred_region
        // Predicated region
        $region17: #{tpu_custom_call.1} parent=15 // pred_check
          %p130 = pneg %p51
        $region18: #{tpu_custom_call.1} parent=15 // pred_check_branch
          %132 = sbr.rel (%p130) target = $region20
        $region19: #{tpu_custom_call.1} parent=15 // pred_region
          %s133 = sand.u32 %s41, 1
          %s134 = scalar_lea.sflag [#allocation5], %s133
          %s135 = sand.u32 %s41, 1
          %s136 = smul.addr %s135, 8
          %s137 = scalar_lea.vmem [#allocation4], %s136
          %s138 = smul.u32 2, %s25
          %140 = vsyncadd %s134, 0
          %s141 = smul.addr %s24, 2
          %s142 = sadd.s32 %s138, %s141
          %s143 = smul.addr %s142, 4
          %s144 = scalar_lea.hbm %s0, %s143
          %s146 = sshll.u32 %s144, 4
          %s147 = int_to_ptr.hbm [resolvable:$true] %s146
          %s148 = sshll.u32 %s137, 4
          %s149 = int_to_ptr.vmem [resolvable:$true] %s148
          %151 = dma.hbm_to_vmem [thread:$0]  %s147, 128, %s149, %s134
        $region20: #{tpu_custom_call.1} parent=15 // pred_fallthru
          _
        // Predicated region
        $region21: #{tpu_custom_call.1} parent=15 // pred_check
          %p152 = pneg %p79
        $region22: #{tpu_custom_call.1} parent=15 // pred_check_branch
          %154 = sbr.rel (%p152) target = $region24
        $region23: #{tpu_custom_call.1} parent=15 // pred_region
          %s155 = sand.u32 %s69, 1
          %s156 = scalar_lea.sflag [#allocation8], %s155
          %s157 = sand.u32 %s69, 1
          %s158 = smul.addr %s157, 2
          %s159 = scalar_lea.vmem [#allocation7], %s158
          %s160 = smul.u32 2, %s25
          %162 = vsyncadd %s156, 0
          %s163 = smul.addr %s24, 2
          %s164 = sadd.s32 %s160, %s163
          %s165 = scalar_lea.hbm %s1, %s164
          %s167 = sshll.u32 %s165, 4
          %s168 = int_to_ptr.hbm [resolvable:$true] %s167
          %s169 = sshll.u32 %s159, 4
          %s170 = int_to_ptr.vmem [resolvable:$true] %s169
          %172 = dma.hbm_to_vmem [thread:$0]  %s168, 32, %s170, %s156
        $region24: #{tpu_custom_call.1} parent=15 // pred_fallthru
          _
      $region16: #{tpu_custom_call.1} parent=5 // pred_fallthru
        _
      %p173 = scmp.le.s32.totalorder 1, %s17
      %p174 = scmp.lt.s32.totalorder %s17, 3
      %p175 = pnand %p173, %p174
      %p176 = pneg %p175
      // Predicated region
      $region25: #{tpu_custom_call.1} parent=5 // pred_check
        _
      $region26: #{tpu_custom_call.1} parent=5 // pred_check_branch
        %178 = sbr.rel (%p175) target = $region28
      $region27: #{tpu_custom_call.1} parent=5 // pred_region
        %s179 = ssub.s32 %s17, 1
        %s180 = sand.u32 %s44, 1
        %s181 = scalar_lea.sflag [#allocation5], %s180
        %s182 = sand.u32 %s44, 1
        %s183 = smul.addr %s182, 8
        %s184 = scalar_lea.vmem [#allocation4], %s183
        // Predicated region
        $region29: #{tpu_custom_call.1} parent=27 // pred_check
          %p185 = pneg %p57
        $region30: #{tpu_custom_call.1} parent=27 // pred_check_branch
          %187 = sbr.rel (%p185) target = $region32
        $region31: #{tpu_custom_call.1} parent=27 // pred_region
          %189 = dma.done %s181, 128
        $region32: #{tpu_custom_call.1} parent=27 // pred_fallthru
          _
        %s190 = sand.u32 %s72, 1
        %s191 = scalar_lea.sflag [#allocation8], %s190
        %s192 = sand.u32 %s72, 1
        %s193 = smul.addr %s192, 2
        %s194 = scalar_lea.vmem [#allocation7], %s193
        // Predicated region
        $region33: #{tpu_custom_call.1} parent=27 // pred_check
          %p195 = pneg %p85
        $region34: #{tpu_custom_call.1} parent=27 // pred_check_branch
          %197 = sbr.rel (%p195) target = $region36
        $region35: #{tpu_custom_call.1} parent=27 // pred_region
          %199 = dma.done %s191, 32
        $region36: #{tpu_custom_call.1} parent=27 // pred_fallthru
          _
        %s200 = sand.u32 %s44, 1
        %s201 = scalar_lea.sflag [#allocation5], %s200
        %s202 = sand.u32 %s44, 1
        %s203 = smul.addr %s202, 8
        %s204 = scalar_lea.vmem [#allocation4], %s203
        %p205 = pneg %p57
        %p206 = pneg %p54
        %s207 = sand.u32 %s72, 1
        %s208 = scalar_lea.sflag [#allocation8], %s207
        %s209 = sand.u32 %s72, 1
        %s210 = smul.addr %s209, 2
        %s211 = scalar_lea.vmem [#allocation7], %s210
        %p212 = pneg %p85
        %p213 = pneg %p82
        %p214 = pneg %p111
        %p215 = pneg %p108
        %s216 = sand.u32 %s98, 1
        %s217 = scalar_lea.sflag [#allocation6], %s216
        %s218 = sand.u32 %s98, 1
        %s219 = smul.addr %s218, 8
        %s220 = scalar_lea.vmem [#allocation9], %s219
        %s221 = smul.u32 2, %s27
        %s222 = smul.u32 2, %s27
        %p223 = scmp.eq.s32.totalorder %s27, 0
        // Predicated region
        $region37: #{tpu_custom_call.1} parent=27 // pred_check
          %p224 = pneg %p223
        $region38: #{tpu_custom_call.1} parent=27 // pred_check_branch
          %226 = sbr.rel (%p224) target = $region40
        $region39: #{tpu_custom_call.1} parent=27 // pred_region
          %227 = vst [vmem:[#allocation2] sm:$0xff] 0.0
          %228 = vst [vmem:[#allocation3] sm:$0xff] 0.0
        $region40: #{tpu_custom_call.1} parent=27 // pred_fallthru
          _
        %v229 = vld [vmem:[%s184] sm:$0xff]
        %v230 = vld [vmem:[%s194] sm:$0x3]
        %s231 = smul.u32 %s27, 256
        %v232 = vlaneseq
        %v233 = vand.u32 %v232, 127
        %v234 = vadd.s32 %v233, 128
        %v235 = vstv %s231
        %v236 = vadd.s32 %v235, %v233
        %v237 = vadd.s32 %v235, %v234
        %vm238 = vcmp.lt.s32.totalorder %v236, 256
        %vm239 = vcmp.lt.s32.totalorder %v237, 256
        %v240 = vsel %vm238, 1, 0
        %v241 = vsel %vm239, 1, 0
        %v242 = vcvt.s32.f32 %v240
        %v243 = vcvt.s32.f32 %v241
        %245 = vst [vmem:[#allocation1] ss:$2 sm:$0xff] %v229
        %v246 = vld.sshfl [vmem:[#allocation1] sm:$0xff pattern:$0x75316420]
        %v247 = vld.sshfl [vmem:[#allocation1 + $0x8] sm:$0xff pattern:$0x75316420]
        %vm250 = vcmask 1043456
        %v251 = vsel %vm250, %v246, -inf
        %v252 = vrot.slane %v251, 4
        %v253 = vmax.f32 %v251, %v252
        %v254 = vrot.slane %v253, 2
        %v255 = vmax.f32 %v253, %v254
        %v256 = vrot.slane %v255, 1
        %v257 = vmax.f32 %v255, %v256
        %v258 = vsel %vm250, %v247, -inf
        %v259 = vrot.slane %v258, 4
        %v260 = vmax.f32 %v258, %v259
        %v261 = vrot.slane %v260, 2
        %v262 = vmax.f32 %v260, %v261
        %v263 = vrot.slane %v262, 1
        %v264 = vmax.f32 %v262, %v263
        %v267 = vrot.slane %v264, 4
        %v268 = vsel %vm250, %v257, %v267
        %v270 = vsub.f32 %v229, %v268
        %v271 = vmul.f32 %v270, 1.442695
        %v272 = vpow.pop %v271
        %274 = vst [vmem:[#allocation1] ss:$2 sm:$0xff] %v272
        %v275 = vld.sshfl [vmem:[#allocation1] sm:$0xff pattern:$0x75316420]
        %v276 = vld.sshfl [vmem:[#allocation1 + $0x8] sm:$0xff pattern:$0x75316420]
        %v279 = vsel %vm250, %v275, 0.0
        %v280 = vrot.slane %v279, 4
        %v281 = vadd.f32 %v279, %v280
        %v282 = vrot.slane %v281, 2
        %v283 = vadd.f32 %v281, %v282
        %v284 = vrot.slane %v283, 1
        %v285 = vadd.f32 %v283, %v284
        %v286 = vsel %vm250, %v276, 0.0
        %v287 = vrot.slane %v286, 4
        %v288 = vadd.f32 %v286, %v287
        %v289 = vrot.slane %v288, 2
        %v290 = vadd.f32 %v288, %v289
        %v291 = vrot.slane %v290, 1
        %v292 = vadd.f32 %v290, %v291
        %v293 = vrcp.pop %v285
        %v294 = vmul.f32 %v285, %v293
        %v295 = vsub.f32 1.0, %v294
        %v296 = vmul.f32 %v293, %v295
        %v297 = vadd.f32 %v293, %v296
        %vm298 = vweird.f32 %v285
        %vm299 = vweird.f32 %v293
        %vm300 = vmor %vm298, %vm299
        %v301 = vsel %vm300, %v293, %v297
        %v302 = vand.u32 2147483647, %v285
        %vm303 = vcmp.eq.f32.partialorder %v302, 8.507059e+37
        %v304 = vand.u32 %v285, 2147483648
        %v305 = vor.u32 1.1754944e-38, %v304
        %v306 = vsel %vm303, %v305, %v301
        %v307 = vrcp.pop %v292
        %v308 = vmul.f32 %v292, %v307
        %v309 = vsub.f32 1.0, %v308
        %v310 = vmul.f32 %v307, %v309
        %v311 = vadd.f32 %v307, %v310
        %vm312 = vweird.f32 %v292
        %vm313 = vweird.f32 %v307
        %vm314 = vmor %vm312, %vm313
        %v315 = vsel %vm314, %v307, %v311
        %v316 = vand.u32 2147483647, %v292
        %vm317 = vcmp.eq.f32.partialorder %v316, 8.507059e+37
        %v318 = vand.u32 %v292, 2147483648
        %v319 = vor.u32 1.1754944e-38, %v318
        %v320 = vsel %vm317, %v319, %v315
        %v321 = vlaneseq
        %v322 = vshrl.u32 %v321, 7
        %v323 = vperm.slane %v230, 0
        %v324 = vperm.slane %v230, 1
        %vm325 = vcmp.eq.s32.totalorder %v322, %v323
        %vm326 = vcmp.eq.s32.totalorder %v322, %v324
        %327 = vst [vmem:[#allocation1] ss:$2 sm:$0xff] %v272
        %v328 = vld.sshfl [vmem:[#allocation1] sm:$0xff pattern:$0x75316420]
        %v329 = vld.sshfl [vmem:[#allocation1 + $0x8] sm:$0xff pattern:$0x75316420]
        %v332 = vsel %vm325, %v328, 0.0
        %v333 = vsel %vm326, %v329, 0.0
        %v334 = vsel %vm250, %v332, 0.0
        %v335 = vrot.slane %v334, 4
        %v336 = vadd.f32 %v334, %v335
        %v337 = vrot.slane %v336, 2
        %v338 = vadd.f32 %v336, %v337
        %v339 = vrot.slane %v338, 1
        %v340 = vadd.f32 %v338, %v339
        %v341 = vsel %vm250, %v333, 0.0
        %v342 = vrot.slane %v341, 4
        %v343 = vadd.f32 %v341, %v342
        %v344 = vrot.slane %v343, 2
        %v345 = vadd.f32 %v343, %v344
        %v346 = vrot.slane %v345, 1
        %v347 = vadd.f32 %v345, %v346
        %vm348 = vcmp.ge.s32.totalorder %v230, 0
        %vm349 = vcmp.lt.s32.totalorder %v230, 4
        %vm350 = vmand %vm348, %vm349
        %v351 = vsel %vm350, 1, 0
        %v352 = vcvt.s32.f32 %v351
        %v353 = vld [vmem:[#allocation2] sm:$0xff]
        %v354 = vmul.f32 %v340, %v306
        %v355 = vmul.f32 %v347, %v320
        %v356 = vmul.f32 %v354, %v242
        %v357 = vmul.f32 %v355, %v243
        %vm358 = vcmask 1040384
        %v359 = vsel %vm358, %v356, 0.0
        %v360 = vsel %vm358, %v357, 0.0
        %v361 = vadd.f32 %v359, %v360
        %362 = vadd.xlane.f32.xlu0 %v361
        %v363 = vpop.xlane.xlu0 %362
        %v364 = vrot.slane %v363, 4
        %v365 = vadd.f32 %v363, %v364
        %v366 = vrot.slane %v365, 2
        %v367 = vadd.f32 %v365, %v366
        %v368 = vrot.slane %v367, 1
        %v369 = vadd.f32 %v367, %v368
        %s370 = vtos %v369
        %v371 = vstv %s370
        %v372 = vadd.f32 %v353, %v371
        %373 = vst [vmem:[#allocation2] sm:$0xff] %v372
        %v374 = vld [vmem:[#allocation3] sm:$0xff]
        %v375 = vmul.f32 %v285, %v306
        %v376 = vmul.f32 %v292, %v320
        %v378 = vperm.slane %v352, 0
        %v379 = vperm.slane %v352, 1
        %v382 = vadd.f32 %v375, %v378
        %v383 = vadd.f32 %v376, %v379
        %v384 = vmul.f32 %v382, %v242
        %v385 = vmul.f32 %v383, %v243
        %v386 = vsel %vm358, %v384, 0.0
        %v387 = vsel %vm358, %v385, 0.0
        %v388 = vadd.f32 %v386, %v387
        %389 = vadd.xlane.f32.xlu0 %v388
        %v390 = vpop.xlane.xlu0 %389
        %v391 = vrot.slane %v390, 4
        %v392 = vadd.f32 %v390, %v391
        %v393 = vrot.slane %v392, 2
        %v394 = vadd.f32 %v392, %v393
        %v395 = vrot.slane %v394, 1
        %v396 = vadd.f32 %v394, %v395
        %s397 = vtos %v396
        %v398 = vstv %s397
        %v399 = vadd.f32 %v374, %v398
        %400 = vst [vmem:[#allocation3] sm:$0xff] %v399
        // Predicated region
        $region41: #{tpu_custom_call.1} parent=27 // pred_check
          %p401 = pneg %p223
        $region42: #{tpu_custom_call.1} parent=27 // pred_check_branch
          %403 = sbr.rel (%p401) target = $region44
        $region43: #{tpu_custom_call.1} parent=27 // pred_region
          %v404 = vld [vmem:[#allocation2] sm:$0xff]
          %v405 = vmul.f32 %v404, 2.0
          %v406 = vadd.f32 %v405, 1.0
          %v407 = vld [vmem:[#allocation3] sm:$0xff]
          %v408 = vadd.f32 %v407, 1.0
          %v409 = vrcp.pop %v408
          %v410 = vmul.f32 %v408, %v409
          %v411 = vsub.f32 1.0, %v410
          %v412 = vmul.f32 %v409, %v411
          %v413 = vadd.f32 %v409, %v412
          %vm414 = vweird.f32 %v408
          %vm415 = vweird.f32 %v409
          %vm416 = vmor %vm414, %vm415
          %v417 = vsel %vm416, %v409, %v413
          %v418 = vand.u32 2147483647, %v408
          %vm419 = vcmp.eq.f32.partialorder %v418, 8.507059e+37
          %v420 = vand.u32 %v408, 2147483648
          %v421 = vor.u32 1.1754944e-38, %v420
          %v422 = vsel %vm419, %v421, %v417
          %v423 = vmul.f32 %v406, %v422
          %424 = vst [vmem:[%s220] sm:$0xff] %v423
        $region44: #{tpu_custom_call.1} parent=27 // pred_fallthru
          _
        %s425 = sand.u32 %s98, 1
        %s426 = scalar_lea.sflag [#allocation6], %s425
        %s427 = sand.u32 %s98, 1
        %s428 = smul.addr %s427, 8
        %s429 = scalar_lea.vmem [#allocation9], %s428
        // Predicated region
        $region45: #{tpu_custom_call.1} parent=27 // pred_check
          %p430 = pneg %p108
        $region46: #{tpu_custom_call.1} parent=27 // pred_check_branch
          %432 = sbr.rel (%p430) target = $region48
        $region47: #{tpu_custom_call.1} parent=27 // pred_region
          %434 = vsyncadd %s426, 0
          %s435 = smul.addr %s26, 8
          %s436 = scalar_lea.hbm %s2, %s435
          %s438 = sshll.u32 %s429, 4
          %s439 = int_to_ptr.vmem [resolvable:$true] %s438
          %s440 = sshll.u32 %s436, 4
          %s441 = int_to_ptr.hbm [resolvable:$true] %s440
          %443 = dma.vmem_to_hbm [thread:$0]  %s439, 128, %s441, %s426
        $region48: #{tpu_custom_call.1} parent=27 // pred_fallthru
          _
      $region28: #{tpu_custom_call.1} parent=5 // pred_fallthru
        _
      %p444 = scmp.le.s32.totalorder 2, %s17
      // Predicated region
      $region49: #{tpu_custom_call.1} parent=5 // pred_check
        %p445 = pneg %p444
      $region50: #{tpu_custom_call.1} parent=5 // pred_check_branch
        %447 = sbr.rel (%p445) target = $region52
      $region51: #{tpu_custom_call.1} parent=5 // pred_region
        %s448 = ssub.s32 %s17, 2
        // Predicated region
        $region53: #{tpu_custom_call.1} parent=51 // pred_check
          %p449 = pneg %p114
        $region54: #{tpu_custom_call.1} parent=51 // pred_check_branch
          %451 = sbr.rel (%p449) target = $region56
        $region55: #{tpu_custom_call.1} parent=51 // pred_region
          %s452 = sand.u32 %s99, 1
          %s453 = scalar_lea.sflag [#allocation6], %s452
          %s454 = sand.u32 %s99, 1
          %s455 = smul.addr %s454, 8
          %s456 = scalar_lea.vmem [#allocation9], %s455
          %458 = dma.done %s453, 128
        $region56: #{tpu_custom_call.1} parent=51 // pred_fallthru
          _
      $region52: #{tpu_custom_call.1} parent=5 // pred_fallthru
        _
    $region6: #{tpu_custom_call.1} parent=1 // loop_footer
      %s21 = sadd.s32 1, %s17
    $region7: #{tpu_custom_call.1} parent=1 // loop_footer_branch
      %16 = sbr.rel target = $region3
    $region8: #{tpu_custom_call.1} parent=1 // loop_exit
      _
    %459 = vsyncpa [#allocation5], 1
    %s460 = scalar_lea.sflag [#allocation5], 1
    %461 = vsyncpa %s460, 1
    %462 = vsyncpa [#allocation8], 1
    %s463 = scalar_lea.sflag [#allocation8], 1
    %464 = vsyncpa %s463, 1
    %465 = vsyncpa [#allocation6], 1
    %s466 = scalar_lea.sflag [#allocation6], 1
    %467 = vsyncpa %s466, 1

</llo_original>
